<compile_context>
chip_gen: v6e
topology: v6e:2x2x1
jax: 0.10.0
libtpu: 0.0.40
codegen_flags: <defaults>
</compile_context>

<pallas_src>
import jax
import jax.numpy as jnp
from jax.experimental import pallas as pl
from jax.experimental.pallas import tpu as pltpu


# --------------------------------------------------------------------------- #
# Helpers
# --------------------------------------------------------------------------- #
def _round_up(x: int, m: int) -> int:
    return (x + m - 1) // m * m


def _cdiv(a: int, b: int) -> int:
    return -(-a // b)


def _aligned(d: int) -> int:
    """Lane alignment (128) for small dims, full MXU width (256) for larger."""
    if d <= 128:
        return 128
    return _round_up(d, 256)


def _pad_cast(arr, shape, dtype):
    """Zero-pad `arr` to `shape` and cast to `dtype`; no-op if already there."""
    dtype = jnp.dtype(dtype)
    arr = jnp.asarray(arr)
    if tuple(arr.shape) == tuple(shape) and arr.dtype == dtype:
        return arr
    out = jnp.zeros(shape, dtype)
    return out.at[tuple(slice(0, s) for s in arr.shape)].set(arr.astype(dtype))


def _vmem_capacity_bytes() -> int:
    try:
        info = pltpu.get_tpu_info()
        cap = int(getattr(info, "vmem_capacity_bytes", 64 * 1024 * 1024))
        if cap <= 0:
            cap = 64 * 1024 * 1024
        return cap
    except Exception:
        # Conservative: v7x has 64 MiB per TensorCore.
        return 64 * 1024 * 1024


# --------------------------------------------------------------------------- #
# Kernels
# --------------------------------------------------------------------------- #
def _tile_fwd(x_ref, w1_ref, b1_ref, w2_ref, act_ref):
    """One (row-tile x FFN-tile) step: matmul1 + bias1 + ReLU, store activation,
    return the f32 partial of matmul2."""
    x = x_ref[...]
    if x.dtype != w1_ref.dtype:
        x = x.astype(w1_ref.dtype)          # in-kernel cast: no wrapper HBM copy
    h = jnp.dot(x, w1_ref[...], preferred_element_type=jnp.float32)
    h = h + b1_ref[...]                     # (1, tf) broadcast, f32
    a = jnp.maximum(h, 0.0)                 # ReLU, f32
    a_mm = a.astype(w2_ref.dtype)           # single cast, reused below
    if act_ref.dtype == a_mm.dtype:
        act_ref[...] = a_mm                 # bit-identical to matmul2 input
    else:
        act_ref[...] = a.astype(act_ref.dtype)
    return jnp.dot(a_mm, w2_ref[...], preferred_element_type=jnp.float32)


def _kernel_resident(x_ref, w1_ref, b1_ref, w2_ref, b2_ref, act_ref, y_ref):
    """Single FFN tile (weights fully resident in VMEM): no accumulator needed."""
    y = _tile_fwd(x_ref, w1_ref, b1_ref, w2_ref, act_ref) + b2_ref[...]
    y_ref[...] = y.astype(y_ref.dtype)


def _make_kernel_tiled(acc_in_out: bool):
    """2-D grid (rows x FFN tiles). f32 outputs accumulate directly into the
    resident y block; otherwise a f32 VMEM scratch is used."""

    def kernel(x_ref, w1_ref, b1_ref, w2_ref, b2_ref, act_ref, y_ref, *maybe_acc):
        acc_ref = y_ref if acc_in_out else maybe_acc[0]
        j = pl.program_id(1)

        @pl.when(j == 0)
        def _():
            acc_ref[...] = jnp.zeros_like(acc_ref)

        acc_ref[...] += _tile_fwd(x_ref, w1_ref, b1_ref, w2_ref, act_ref)

        @pl.when(j == pl.num_programs(1) - 1)
        def _():
            if acc_in_out:
                y_ref[...] = y_ref[...] + b2_ref[...]
            else:
                y_ref[...] = (acc_ref[...] + b2_ref[...]).astype(y_ref.dtype)

    return kernel


# --------------------------------------------------------------------------- #
# Tile selection
# --------------------------------------------------------------------------- #
_TM_CANDS = (1024, 512, 256, 128, 64, 32, 16, 8)


def _choose_tiles(N, d_pad, f_pad, o_pad, x_bytes, cdt_bytes, out_bytes,
                  acc_in_out, vmem_budget, tm_max=None, tf_max=None):
    def row_tiling(tm_cap):
        if N <= 8:
            n_rt = 1
        else:
            # >=2 row tiles so the "parallel" axis shards across both v7x TCs,
            # and tm sized to the work so padded-row waste stays small.
            n_rt = max(_cdiv(N, tm_cap), 2)
        tm = _round_up(_cdiv(N, n_rt), 8)
        return tm, n_rt

    def est(tm, tf):
        e = 2 * tm * d_pad * x_bytes            # x tile (double-buffered)
        e += 2 * d_pad * tf * cdt_bytes         # w1 column tile
        e += 2 * 8 * tf * 4                     # b1 tile (sublane-padded, f32)
        e += 2 * tf * o_pad * cdt_bytes         # w2 row tile
        e += 2 * 8 * o_pad * 4                  # b2
        e += 2 * tm * tf * out_bytes            # activation output tile
        e += 2 * tm * o_pad * out_bytes         # y output tile (resident)
        if not acc_in_out:
            e += tm * o_pad * 4                 # f32 accumulator scratch
        return e

    tm_cands = [t for t in _TM_CANDS if tm_max is None or t <= tm_max] or [8]

    # FFN-tile candidates: divisors of f_pad that are multiples of 128, desc.
    tf_cands = []
    nf = 1
    while nf * 128 <= f_pad:
        if f_pad % nf == 0 and (f_pad // nf) % 128 == 0:
            tf_cands.append(f_pad // nf)
        nf += 1
    if not tf_cands:
        tf_cands = [f_pad]
    if tf_max is not None:
        limited = [t for t in tf_cands if t <= tf_max]
        tf_cands = limited if limited else [tf_cands[-1]]

    # Phase 1: weights fully resident (single FFN tile) -> zero re-streaming.
    if tf_cands[0] == f_pad:
        for tm_cap in tm_cands:
            tm, n_rt = row_tiling(tm_cap)
            if est(tm, f_pad) <= vmem_budget:
                return tm, n_rt, f_pad, 1

    # Phase 2: tile the FFN dim; prioritize large tm (weight-traffic lever).
    for tm_cap in tm_cands:
        tm, n_rt = row_tiling(tm_cap)
        for tf in tf_cands:
            if tf == f_pad and tf_cands[0] == f_pad:
                continue  # already rejected in phase 1
            if est(tm, tf) <= vmem_budget:
                return tm, n_rt, tf, f_pad // tf

    # Fallback: smallest tiles, let the compiler have the final word.
    tm, n_rt = row_tiling(tm_cands[-1])
    tf = tf_cands[-1]
    return tm, n_rt, tf, f_pad // tf


# --------------------------------------------------------------------------- #
# Forward wrapper
# --------------------------------------------------------------------------- #
def mlp2_forward(x, w1, b1, w2, b2, *, ffn_dim=None, out_dim=None,
                 compute_dtype=jnp.bfloat16, tm_max=None, tf_max=None):
    """x: (N, model_dim); w1: (model_dim, ffn); w2: (ffn, out_dim).
    Weights may be passed pre-padded (see MLP2LayerPallas) together with the
    logical ffn_dim / out_dim. Returns (before_linear2 (N, ffn), y (N, out))."""
    N, D = x.shape
    F = int(ffn_dim) if ffn_dim is not None else int(w1.shape[1])
    O = int(out_dim) if out_dim is not None else int(w2.shape[1])

    out_dtype = x.dtype
    cdt = jnp.dtype(compute_dtype)
    acc_in_out = jnp.dtype(out_dtype) == jnp.dtype(jnp.float32)

    d_pad, f_pad, o_pad = _aligned(D), _aligned(F), _aligned(O)

    vmem_cap = _vmem_capacity_bytes()
    vmem_budget = int(vmem_cap * 0.70)
    vmem_limit = min(int(vmem_cap * 0.90), 128 * 1024 * 1024)

    tm, n_row_tiles, tf, n_f_tiles = _choose_tiles(
        N, d_pad, f_pad, o_pad,
        jnp.dtype(x.dtype).itemsize, cdt.itemsize, jnp.dtype(out_dtype).itemsize,
        acc_in_out, vmem_budget, tm_max=tm_max, tf_max=tf_max)
    n_pad_rows = tm * n_row_tiles

    # Pad only when needed (no-op in the common pre-padded / aligned case).
    # x keeps its own dtype; the cast to compute dtype happens in-kernel.
    xp = _pad_cast(x, (n_pad_rows, d_pad), x.dtype)
    w1p = _pad_cast(w1, (d_pad, f_pad), cdt)
    b1p = _pad_cast(jnp.asarray(b1).reshape(1, -1), (1, f_pad), jnp.float32)
    w2p = _pad_cast(w2, (f_pad, o_pad), cdt)
    b2p = _pad_cast(jnp.asarray(b2).reshape(1, -1), (1, o_pad), jnp.float32)

    if n_f_tiles == 1:
        kernel = _kernel_resident
        grid = (n_row_tiles,)
        in_specs = [
            pl.BlockSpec((tm, d_pad), lambda i: (i, 0)),      # x row tile
            pl.BlockSpec((d_pad, f_pad), lambda i: (0, 0)),   # w1 (resident)
            pl.BlockSpec((1, f_pad), lambda i: (0, 0)),       # b1 (resident)
            pl.BlockSpec((f_pad, o_pad), lambda i: (0, 0)),   # w2 (resident)
            pl.BlockSpec((1, o_pad), lambda i: (0, 0)),       # b2 (resident)
        ]
        out_specs = [
            pl.BlockSpec((tm, f_pad), lambda i: (i, 0)),      # activation
            pl.BlockSpec((tm, o_pad), lambda i: (i, 0)),      # y
        ]
        scratch_shapes = []
        dim_sem = ("parallel",)
        weight_streams = 1
    else:
        kernel = _make_kernel_tiled(acc_in_out)
        grid = (n_row_tiles, n_f_tiles)                       # FFN (reduction) last
        in_specs = [
            pl.BlockSpec((tm, d_pad), lambda i, j: (i, 0)),   # x row tile
            pl.BlockSpec((d_pad, tf), lambda i, j: (0, j)),   # w1 column tile
            pl.BlockSpec((1, tf), lambda i, j: (0, j)),       # b1 tile
            pl.BlockSpec((tf, o_pad), lambda i, j: (j, 0)),   # w2 row tile
            pl.BlockSpec((1, o_pad), lambda i, j: (0, 0)),    # b2 (resident)
        ]
        out_specs = [
            pl.BlockSpec((tm, tf), lambda i, j: (i, j)),      # activation tile
            pl.BlockSpec((tm, o_pad), lambda i, j: (i, 0)),   # y (resident over j)
        ]
        scratch_shapes = [] if acc_in_out else [pltpu.VMEM((tm, o_pad), jnp.float32)]
        dim_sem = ("parallel", "arbitrary")
        weight_streams = n_row_tiles                          # re-read per row tile

    flops = 2 * n_pad_rows * d_pad * f_pad + 2 * n_pad_rows * f_pad * o_pad
    bytes_accessed = (
        n_pad_rows * d_pad * jnp.dtype(x.dtype).itemsize
        + (d_pad * f_pad + f_pad * o_pad) * cdt.itemsize * weight_streams
        + (f_pad + o_pad) * 4
        + (n_pad_rows * f_pad + n_pad_rows * o_pad) * jnp.dtype(out_dtype).itemsize)

    grid_spec = pltpu.PrefetchScalarGridSpec(
        num_scalar_prefetch=0,
        grid=grid,
        in_specs=in_specs,
        out_specs=out_specs,
        scratch_shapes=scratch_shapes,
    )

    act_p, y_p = pl.pallas_call(
        kernel,
        grid_spec=grid_spec,
        out_shape=(
            jax.ShapeDtypeStruct((n_pad_rows, f_pad), out_dtype),
            jax.ShapeDtypeStruct((n_pad_rows, o_pad), out_dtype),
        ),
        compiler_params=pltpu.CompilerParams(
            dimension_semantics=dim_sem,
            vmem_limit_bytes=vmem_limit,
        ),
        cost_estimate=pl.CostEstimate(flops=flops, transcendentals=0,
                                      bytes_accessed=bytes_accessed),
    )(xp, w1p, b1p, w2p, b2p)

    # Padded rows/cols (garbage rows contain relu(b1)@w2 + b2) are sliced off.
    return act_p[:N, :F], y_p[:N, :O]


# --------------------------------------------------------------------------- #
# Module wrapper (activation_type='ReLU', use_te=False, USE_BIAS=True)
# --------------------------------------------------------------------------- #
class MLP2LayerPallas:
    """Deterministically-initialized JAX/Pallas equivalent of MLP2Layer."""

    def __init__(self, model_dim, ffn_inner_dim, out_dim, key, *,
                 compute_dtype=jnp.bfloat16):
        k1, k2, k3, k4 = jax.random.split(key, 4)
        lim1 = 1.0 / jnp.sqrt(model_dim)
        lim2 = 1.0 / jnp.sqrt(ffn_inner_dim)
        # Stored as (in, out): torch weight (out, in) transposed.
        self.w1 = jax.random.uniform(k1, (model_dim, ffn_inner_dim),
                                     jnp.float32, -lim1, lim1)
        self.b1 = jax.random.uniform(k2, (ffn_inner_dim,), jnp.float32, -lim1, lim1)
        self.w2 = jax.random.uniform(k3, (ffn_inner_dim, out_dim),
                                     jnp.float32, -lim2, lim2)
        self.b2 = jax.random.uniform(k4, (out_dim,), jnp.float32, -lim2, lim2)

        self.model_dim, self.ffn_inner_dim, self.out_dim = model_dim, ffn_inner_dim, out_dim
        self.compute_dtype = jnp.dtype(compute_dtype)

        # Pad + cast weights ONCE at init -> no per-call HBM pad copies.
        d_pad, f_pad, o_pad = _aligned(model_dim), _aligned(ffn_inner_dim), _aligned(out_dim)
        self.w1_p = _pad_cast(self.w1, (d_pad, f_pad), self.compute_dtype)
        self.b1_p = _pad_cast(self.b1.reshape(1, -1), (1, f_pad), jnp.float32)
        self.w2_p = _pad_cast(self.w2, (f_pad, o_pad), self.compute_dtype)
        self.b2_p = _pad_cast(self.b2.reshape(1, -1), (1, o_pad), jnp.float32)

    def __call__(self, x):
        lead = x.shape[:-1]
        x2 = x.reshape(-1, x.shape[-1])
        act, out = mlp2_forward(x2, self.w1_p, self.b1_p, self.w2_p, self.b2_p,
                                ffn_dim=self.ffn_inner_dim, out_dim=self.out_dim,
                                compute_dtype=self.compute_dtype)
        return (act.reshape(*lead, self.ffn_inner_dim),
                out.reshape(*lead, self.out_dim))


# --------------------------------------------------------------------------- #
# Self-test
# --------------------------------------------------------------------------- #
if __name__ == "__main__":
    key = jax.random.PRNGKey(0)
    k_x, k_p = jax.random.split(key)

    batch, seq = 2, 8
    model_dim, ffn_inner_dim, out_dim = 32, 64, 32

    x = jax.random.normal(k_x, (batch, seq, model_dim), jnp.float32)
    x2 = x.reshape(-1, model_dim)

    # 1) Default bf16-compute path (fast MXU), resident-weight kernel.
    mlp_bf16 = MLP2LayerPallas(model_dim, ffn_inner_dim, out_dim, k_p,
                               compute_dtype=jnp.bfloat16)
    act_bf16, y_bf16 = mlp_bf16(x)
    jax.block_until_ready((act_bf16, y_bf16))
    assert act_bf16.shape == (batch, seq, ffn_inner_dim)
    assert y_bf16.shape == (batch, seq, out_dim)

    h_ref = jnp.dot(x2.astype(jnp.bfloat16), mlp_bf16.w1.astype(jnp.bfloat16),
                    preferred_element_type=jnp.float32) + mlp_bf16.b1
    a_ref = jnp.maximum(h_ref, 0.0)
    y_ref = jnp.dot(a_ref.astype(jnp.bfloat16), mlp_bf16.w2.astype(jnp.bfloat16),
                    preferred_element_type=jnp.float32) + mlp_bf16.b2
    assert jnp.allclose(act_bf16.reshape(-1, ffn_inner_dim), a_ref, atol=2e-2, rtol=2e-2)
    assert jnp.allclose(y_bf16.reshape(-1, out_dim), y_ref, atol=2e-2, rtol=2e-2)

    # 2) f32-compute path: tight numerical check vs plain-JAX reference.
    mlp_f32 = MLP2LayerPallas(model_dim, ffn_inner_dim, out_dim, k_p,
                              compute_dtype=jnp.float32)
    act_f32, y_f32 = mlp_f32(x)
    jax.block_until_ready((act_f32, y_f32))
    h32 = x2 @ mlp_f32.w1 + mlp_f32.b1
    a32 = jnp.maximum(h32, 0.0)
    y32 = a32 @ mlp_f32.w2 + mlp_f32.b2
    assert jnp.allclose(act_f32.reshape(-1, ffn_inner_dim), a32, atol=1e-5, rtol=1e-5)
    assert jnp.allclose(y_f32.reshape(-1, out_dim), y32, atol=1e-5, rtol=1e-5)

    # 3) Force the tiled-FFN (2-D grid) kernel path: f32 out -> acc into y_ref.
    F2 = 256
    k1, k2, k3, k4 = jax.random.split(k_p, 4)
    w1b = jax.random.uniform(k1, (model_dim, F2), jnp.float32, -0.1, 0.1)
    b1b = jax.random.uniform(k2, (F2,), jnp.float32, -0.1, 0.1)
    w2b = jax.random.uniform(k3, (F2, out_dim), jnp.float32, -0.1, 0.1)
    b2b = jax.random.uniform(k4, (out_dim,), jnp.float32, -0.1, 0.1)
    act_t, y_t = mlp2_forward(x2, w1b, b1b, w2b, b2b,
                              compute_dtype=jnp.float32, tf_max=128)
    jax.block_until_ready((act_t, y_t))
    ht = x2 @ w1b + b1b
    at = jnp.maximum(ht, 0.0)
    yt = at @ w2b + b2b
    assert jnp.allclose(act_t, at, atol=1e-5, rtol=1e-5)
    assert jnp.allclose(y_t, yt, atol=1e-5, rtol=1e-5)

    # 4) Tiled path with bf16 output -> f32 scratch accumulator branch.
    xb = x2.astype(jnp.bfloat16)
    act_b, y_b = mlp2_forward(xb, w1b, b1b, w2b, b2b,
                              compute_dtype=jnp.bfloat16, tf_max=128)
    jax.block_until_ready((act_b, y_b))
    htb = jnp.dot(xb, w1b.astype(jnp.bfloat16),
                  preferred_element_type=jnp.float32) + b1b
    atb = jnp.maximum(htb, 0.0)
    ytb = jnp.dot(atb.astype(jnp.bfloat16), w2b.astype(jnp.bfloat16),
                  preferred_element_type=jnp.float32) + b2b
    assert jnp.allclose(act_b.astype(jnp.float32), atb, atol=3e-2, rtol=3e-2)
    assert jnp.allclose(y_b.astype(jnp.float32), ytb, atol=3e-2, rtol=3e-2)

    print("KERNEL_OK")
</pallas_src>

<mosaic_0001>
module attributes {stable_mosaic.version = 11 : i64} {
  func.func @_kernel_resident(%arg0: i32, %arg1: memref<8x128xf32, #tpu.memory_space<vmem>>, %arg2: memref<128x128xbf16, #tpu.memory_space<vmem>>, %arg3: memref<1x128xf32, #tpu.memory_space<vmem>>, %arg4: memref<128x128xbf16, #tpu.memory_space<vmem>>, %arg5: memref<1x128xf32, #tpu.memory_space<vmem>>, %arg6: memref<8x128xf32, #tpu.memory_space<vmem>>, %arg7: memref<8x128xf32, #tpu.memory_space<vmem>>) attributes {dimension_semantics = [#tpu.dimension_semantics<parallel>], iteration_bounds = array<i64: 2>, scalar_prefetch = 0 : i64, scratch_operands = 0 : i64, tpu.core_type = #tpu.core_type<tc>, window_params = [{transform_indices = @transform_0, window_bounds = array<i64: 8, 128>}, {pipeline_mode = #tpu.pipeline_mode<synchronous>, transform_indices = @transform_1, window_bounds = array<i64: 128, 128>}, {pipeline_mode = #tpu.pipeline_mode<synchronous>, transform_indices = @transform_2, window_bounds = array<i64: 1, 128>}, {pipeline_mode = #tpu.pipeline_mode<synchronous>, transform_indices = @transform_3, window_bounds = array<i64: 128, 128>}, {pipeline_mode = #tpu.pipeline_mode<synchronous>, transform_indices = @transform_4, window_bounds = array<i64: 1, 128>}, {transform_indices = @transform_5, window_bounds = array<i64: 8, 128>}, {transform_indices = @transform_6, window_bounds = array<i64: 8, 128>}]} {
    %c0 = arith.constant 0 : index
    %c0_0 = arith.constant 0 : index
    %0 = vector.load %arg1[%c0, %c0_0] : memref<8x128xf32, #tpu.memory_space<vmem>>, vector<8x128xf32>
    %1 = arith.truncf %0 : vector<8x128xf32> to vector<8x128xbf16>
    %c0_1 = arith.constant 0 : index
    %c0_2 = arith.constant 0 : index
    %2 = vector.load %arg2[%c0_1, %c0_2] : memref<128x128xbf16, #tpu.memory_space<vmem>>, vector<128x128xbf16>
    %cst = arith.constant dense<0.000000e+00> : vector<8x128xf32>
    %3 = tpu.matmul %1, %2, %cst {dimension_numbers = #tpu.dot_dimension_numbers<[1], [0], [0], [1], [0, 0, 1, 1], [], []>} : vector<8x128xbf16>, vector<128x128xbf16>, vector<8x128xf32> -> vector<8x128xf32>
    %c0_3 = arith.constant 0 : index
    %c0_4 = arith.constant 0 : index
    %4 = vector.load %arg3[%c0_3, %c0_4] : memref<1x128xf32, #tpu.memory_space<vmem>>, vector<1x128xf32>
    %5 = vector.broadcast %4 : vector<1x128xf32> to vector<8x128xf32>
    %6 = arith.addf %3, %5 : vector<8x128xf32>
    %cst_5 = arith.constant 0.000000e+00 : f32
    %7 = vector.broadcast %cst_5 : f32 to vector<8x128xf32>
    %8 = arith.maximumf %6, %7 : vector<8x128xf32>
    %9 = arith.truncf %8 : vector<8x128xf32> to vector<8x128xbf16>
    %c0_6 = arith.constant 0 : index
    %c0_7 = arith.constant 0 : index
    %10 = vector.load %arg6[%c0_6, %c0_7] : memref<8x128xf32, #tpu.memory_space<vmem>>, vector<8x128xf32>
    tpu.vector_store %arg6[%c0_6, %c0_7], %8 {strides = array<i32>} : memref<8x128xf32, #tpu.memory_space<vmem>>, vector<8x128xf32>,
    %c0_8 = arith.constant 0 : index
    %c0_9 = arith.constant 0 : index
    %11 = vector.load %arg4[%c0_8, %c0_9] : memref<128x128xbf16, #tpu.memory_space<vmem>>, vector<128x128xbf16>
    %cst_10 = arith.constant dense<0.000000e+00> : vector<8x128xf32>
    %12 = tpu.matmul %9, %11, %cst_10 {dimension_numbers = #tpu.dot_dimension_numbers<[1], [0], [0], [1], [0, 0, 1, 1], [], []>} : vector<8x128xbf16>, vector<128x128xbf16>, vector<8x128xf32> -> vector<8x128xf32>
    %c0_11 = arith.constant 0 : index
    %c0_12 = arith.constant 0 : index
    %13 = vector.load %arg5[%c0_11, %c0_12] : memref<1x128xf32, #tpu.memory_space<vmem>>, vector<1x128xf32>
    %14 = vector.broadcast %13 : vector<1x128xf32> to vector<8x128xf32>
    %15 = arith.addf %12, %14 : vector<8x128xf32>
    %c0_13 = arith.constant 0 : index
    %c0_14 = arith.constant 0 : index
    %16 = vector.load %arg7[%c0_13, %c0_14] : memref<8x128xf32, #tpu.memory_space<vmem>>, vector<8x128xf32>
    tpu.vector_store %arg7[%c0_13, %c0_14], %15 {strides = array<i32>} : memref<8x128xf32, #tpu.memory_space<vmem>>, vector<8x128xf32>,
    return
  }
  func.func @transform_0(%arg0: i32) -> (i32, i32) {
    %c0_i32 = arith.constant 0 : i32
    %c0_i32_0 = arith.constant 0 : i32
    return %arg0, %c0_i32 : i32, i32
  }
  func.func @transform_1(%arg0: i32) -> (i32, i32) {
    %c0_i32 = arith.constant 0 : i32
    %c0_i32_0 = arith.constant 0 : i32
    %c0_i32_1 = arith.constant 0 : i32
    return %c0_i32, %c0_i32_0 : i32, i32
  }
  func.func @transform_2(%arg0: i32) -> (i32, i32) {
    %c0_i32 = arith.constant 0 : i32
    %c0_i32_0 = arith.constant 0 : i32
    %c0_i32_1 = arith.constant 0 : i32
    return %c0_i32, %c0_i32_0 : i32, i32
  }
  func.func @transform_3(%arg0: i32) -> (i32, i32) {
    %c0_i32 = arith.constant 0 : i32
    %c0_i32_0 = arith.constant 0 : i32
    %c0_i32_1 = arith.constant 0 : i32
    return %c0_i32, %c0_i32_0 : i32, i32
  }
  func.func @transform_4(%arg0: i32) -> (i32, i32) {
    %c0_i32 = arith.constant 0 : i32
    %c0_i32_0 = arith.constant 0 : i32
    %c0_i32_1 = arith.constant 0 : i32
    return %c0_i32, %c0_i32_0 : i32, i32
  }
  func.func @transform_5(%arg0: i32) -> (i32, i32) {
    %c0_i32 = arith.constant 0 : i32
    %c0_i32_0 = arith.constant 0 : i32
    return %arg0, %c0_i32 : i32, i32
  }
  func.func @transform_6(%arg0: i32) -> (i32, i32) {
    %c0_i32 = arith.constant 0 : i32
    %c0_i32_0 = arith.constant 0 : i32
    return %arg0, %c0_i32 : i32, i32
  }
}

</mosaic_0001>

<llo_original>
// kernel: tpu_custom_call.1
$region0: #{tpu_custom_call.1}
  #allocation0 [shape = 'u32[]', space=smem, size = 0x4, offset = 0x4, fixed_abs, tag = 'smem constant byte address 0x4 - core index']
  #allocation1 [shape = 'u32[144,128]{1,0:T(1,128)}', space=vmem, size = 0x12000, scoped, tag = 'internal scratch']
  %s0 = inlined_call_operand.hbm [shape: f32[16,128], index: 0, kind: input, shape index: {}]
  %s1 = inlined_call_operand.hbm [shape: bf16[128,128], index: 1, kind: input, shape index: {}]
  %s2 = inlined_call_operand.vmem [shape: f32[1,128], index: 2, kind: input, shape index: {}]
  %s3 = inlined_call_operand.hbm [shape: bf16[128,128], index: 3, kind: input, shape index: {}]
  %s4 = inlined_call_operand.vmem [shape: f32[1,128], index: 4, kind: input, shape index: {}]
  %s5 = inlined_call_operand.hbm [shape: f32[16,128], index: 5, kind: output, shape index: {0}]
  %s6 = inlined_call_operand.hbm [shape: f32[16,128], index: 6, kind: output, shape index: {1}]
  %7 = xla_tuple %s5, %s6
  %s8 = sld [smem:[#allocation0]]
  $region73: #{tpu_custom_call.1} parent=0
    _
  %s10 = ssub.s32 1, %s8
  %s11 = scalar_select 0, %s10, %s8
  $region1: #{tpu_custom_call.1} parent=0
    #allocation2 [shape = 'u8[8192]{0}', space=vmem, size = 0x2000, scoped, tag = 'input window, operand 0']
    #allocation3 [shape = 's32[2]{0}', space=sflag, size = 0x8, scoped, tag = 'scoped memory for tpu_custom_call.1']
    #allocation4 [shape = 's32[2]{0}', space=sflag, size = 0x8, scoped, tag = 'scoped memory for tpu_custom_call.1']
    #allocation5 [shape = 'u8[32768]{0}', space=vmem, size = 0x8000, scoped, tag = 'input window, operand 1, single buffered']
    #allocation6 [shape = 's32[1]{0}', space=sflag, size = 0x4, scoped, tag = 'scoped memory for tpu_custom_call.1']
    #allocation7 [shape = 'u8[32768]{0}', space=vmem, size = 0x8000, scoped, tag = 'input window, operand 3, single buffered']
    #allocation8 [shape = 'u8[8192]{0}', space=vmem, size = 0x2000, scoped, tag = 'output window, operand 0']
    #allocation9 [shape = 'u8[8192]{0}', space=vmem, size = 0x2000, scoped, tag = 'output window, operand 1']
    #allocation10 [shape = 's32[2]{0}', space=sflag, size = 0x8, scoped, tag = 'scoped memory for tpu_custom_call.1']
    %12 = vsyncpa [#allocation3], 0
    %s13 = scalar_lea.sflag [#allocation3], 1
    %14 = vsyncpa %s13, 0
    %15 = vsyncpa [#allocation6], 0
    %16 = vsyncpa [#allocation4], 0
    %s17 = scalar_lea.sflag [#allocation4], 1
    %18 = vsyncpa %s17, 0
    %19 = vsyncpa [#allocation10], 0
    %s20 = scalar_lea.sflag [#allocation10], 1
    %21 = vsyncpa %s20, 0
    loop: start=0, step=1, limit=4
    $region2: #{tpu_custom_call.1} parent=1 // loop_pre_header
      _
    $region3: #{tpu_custom_call.1} parent=1 // loop_header
      %s23 = sphi 0, %s27
      %p24 = scmp.ge.s32.totalorder %s23, 4
      %s33 = sphi 0, %s35
      %s36 = sphi 0, %s33
      %s37 = sphi 0, %s36
      %s53 = sphi 0, %s37
      %s57 = sphi 0, %s57
      %s59 = sphi 0, %s57
      %s60 = sphi 0, %s59
      %s74 = sphi 0, %s60
      %s78 = sphi 0, %s78
      %s80 = sphi 0, %s78
      %s81 = sphi 0, %s80
      %s95 = sphi 0, %s81
      %s99 = sphi 0, %s99
      %s101 = sphi 0, %s99
      %s102 = sphi 0, %s101
      %s116 = sphi 0, %s102
      %s120 = sphi 0, %s120
      %s122 = sphi 0, %s120
      %s123 = sphi 0, %s122
      %s137 = sphi 0, %s123
      %s143 = sphi 0, %s145
      %s146 = sphi 0, %s143
      %s147 = sphi 0, %s146
      %s163 = sphi 0, %s147
      %s169 = sphi 0, %s171
      %s172 = sphi 0, %s169
      %s173 = sphi 0, %s172
      %s189 = sphi 0, %s173
    $region4: #{tpu_custom_call.1} parent=1 // loop_header_branch
      %26 = sbr.rel (%p24) target = $region8
    $region5: #{tpu_custom_call.1} parent=1 // loop_body
      %s28 = ssub.s32 %s23, 1
      %s29 = ssub.s32 %s23, 2
      %s30 = sadd.s32 %s23, 1
      %s31 = ssub.s32 %s23, %s30
      %p32 = scmp.eq.s32.totalorder %s31, 0
      %s34 = sadd.s32 %s33, 1
      %s35 = scalar_select %p32, %s33, %s34
      %p38 = pneg %p32
      %p39 = scmp.eq.s32.totalorder %s23, 1
      %p40 = por %p38, %p39
      %p41 = scmp.ne.s32.totalorder %s33, %s36
      %p42 = scmp.eq.s32.totalorder %s23, 0
      %p43 = por %p41, %p42
      %p44 = scmp.ne.s32.totalorder %s33, %s36
      %p45 = scmp.eq.s32.totalorder %s28, 1
      %p46 = por %p44, %p45
      %p47 = scmp.ne.s32.totalorder %s36, %s37
      %p48 = scmp.eq.s32.totalorder %s28, 0
      %p49 = por %p47, %p48
      %p50 = scmp.ne.s32.totalorder %s36, %s37
      %p51 = scmp.eq.s32.totalorder %s29, 1
      %p52 = por %p50, %p51
      %p54 = scmp.ne.s32.totalorder %s37, %s53
      %p55 = scmp.eq.s32.totalorder %s29, 0
      %p56 = por %p54, %p55
      %s58 = sadd.s32 %s57, 1
      %p61 = scmp.eq.s32.totalorder %s23, 1
      %p62 = scmp.ne.s32.totalorder %s57, %s59
      %p63 = scmp.eq.s32.totalorder %s23, 0
      %p64 = por %p62, %p63
      %p65 = scmp.ne.s32.totalorder %s57, %s59
      %p66 = scmp.eq.s32.totalorder %s28, 1
      %p67 = por %p65, %p66
      %p68 = scmp.ne.s32.totalorder %s59, %s60
      %p69 = scmp.eq.s32.totalorder %s28, 0
      %p70 = por %p68, %p69
      %p71 = scmp.ne.s32.totalorder %s59, %s60
      %p72 = scmp.eq.s32.totalorder %s29, 1
      %p73 = por %p71, %p72
      %p75 = scmp.ne.s32.totalorder %s60, %s74
      %p76 = scmp.eq.s32.totalorder %s29, 0
      %p77 = por %p75, %p76
      %s79 = sadd.s32 %s78, 1
      %p82 = scmp.eq.s32.totalorder %s23, 1
      %p83 = scmp.ne.s32.totalorder %s78, %s80
      %p84 = scmp.eq.s32.totalorder %s23, 0
      %p85 = por %p83, %p84
      %p86 = scmp.ne.s32.totalorder %s78, %s80
      %p87 = scmp.eq.s32.totalorder %s28, 1
      %p88 = por %p86, %p87
      %p89 = scmp.ne.s32.totalorder %s80, %s81
      %p90 = scmp.eq.s32.totalorder %s28, 0
      %p91 = por %p89, %p90
      %p92 = scmp.ne.s32.totalorder %s80, %s81
      %p93 = scmp.eq.s32.totalorder %s29, 1
      %p94 = por %p92, %p93
      %p96 = scmp.ne.s32.totalorder %s81, %s95
      %p97 = scmp.eq.s32.totalorder %s29, 0
      %p98 = por %p96, %p97
      %s100 = sadd.s32 %s99, 1
      %p103 = scmp.eq.s32.totalorder %s23, 1
      %p104 = scmp.ne.s32.totalorder %s99, %s101
      %p105 = scmp.eq.s32.totalorder %s23, 0
      %p106 = por %p104, %p105
      %p107 = scmp.ne.s32.totalorder %s99, %s101
      %p108 = scmp.eq.s32.totalorder %s28, 1
      %p109 = por %p107, %p108
      %p110 = scmp.ne.s32.totalorder %s101, %s102
      %p111 = scmp.eq.s32.totalorder %s28, 0
      %p112 = por %p110, %p111
      %p113 = scmp.ne.s32.totalorder %s101, %s102
      %p114 = scmp.eq.s32.totalorder %s29, 1
      %p115 = por %p113, %p114
      %p117 = scmp.ne.s32.totalorder %s102, %s116
      %p118 = scmp.eq.s32.totalorder %s29, 0
      %p119 = por %p117, %p118
      %s121 = sadd.s32 %s120, 1
      %p124 = scmp.eq.s32.totalorder %s23, 1
      %p125 = scmp.ne.s32.totalorder %s120, %s122
      %p126 = scmp.eq.s32.totalorder %s23, 0
      %p127 = por %p125, %p126
      %p128 = scmp.ne.s32.totalorder %s120, %s122
      %p129 = scmp.eq.s32.totalorder %s28, 1
      %p130 = por %p128, %p129
      %p131 = scmp.ne.s32.totalorder %s122, %s123
      %p132 = scmp.eq.s32.totalorder %s28, 0
      %p133 = por %p131, %p132
      %p134 = scmp.ne.s32.totalorder %s122, %s123
      %p135 = scmp.eq.s32.totalorder %s29, 1
      %p136 = por %p134, %p135
      %p138 = scmp.ne.s32.totalorder %s123, %s137
      %p139 = scmp.eq.s32.totalorder %s29, 0
      %p140 = por %p138, %p139
      %s141 = ssub.s32 %s23, %s30
      %p142 = scmp.eq.s32.totalorder %s141, 0
      %s144 = sadd.s32 %s143, 1
      %s145 = scalar_select %p142, %s143, %s144
      %p148 = pneg %p142
      %p149 = scmp.eq.s32.totalorder %s23, 1
      %p150 = por %p148, %p149
      %p151 = scmp.ne.s32.totalorder %s143, %s146
      %p152 = scmp.eq.s32.totalorder %s23, 0
      %p153 = por %p151, %p152
      %p154 = scmp.ne.s32.totalorder %s143, %s146
      %p155 = scmp.eq.s32.totalorder %s28, 1
      %p156 = por %p154, %p155
      %p157 = scmp.ne.s32.totalorder %s146, %s147
      %p158 = scmp.eq.s32.totalorder %s28, 0
      %p159 = por %p157, %p158
      %p160 = scmp.ne.s32.totalorder %s146, %s147
      %p161 = scmp.eq.s32.totalorder %s29, 1
      %p162 = por %p160, %p161
      %p164 = scmp.ne.s32.totalorder %s147, %s163
      %p165 = scmp.eq.s32.totalorder %s29, 0
      %p166 = por %p164, %p165
      %s167 = ssub.s32 %s23, %s30
      %p168 = scmp.eq.s32.totalorder %s167, 0
      %s170 = sadd.s32 %s169, 1
      %s171 = scalar_select %p168, %s169, %s170
      %p174 = pneg %p168
      %p175 = scmp.eq.s32.totalorder %s23, 1
      %p176 = por %p174, %p175
      %p177 = scmp.ne.s32.totalorder %s169, %s172
      %p178 = scmp.eq.s32.totalorder %s23, 0
      %p179 = por %p177, %p178
      %p180 = scmp.ne.s32.totalorder %s169, %s172
      %p181 = scmp.eq.s32.totalorder %s28, 1
      %p182 = por %p180, %p181
      %p183 = scmp.ne.s32.totalorder %s172, %s173
      %p184 = scmp.eq.s32.totalorder %s28, 0
      %p185 = por %p183, %p184
      %p186 = scmp.ne.s32.totalorder %s172, %s173
      %p187 = scmp.eq.s32.totalorder %s29, 1
      %p188 = por %p186, %p187
      %p190 = scmp.ne.s32.totalorder %s173, %s189
      %p191 = scmp.eq.s32.totalorder %s29, 0
      %p192 = por %p190, %p191
      %p193 = scmp.le.s32.totalorder 1, %s23
      %p194 = scmp.lt.s32.totalorder %s23, 3
      %p195 = pnand %p193, %p194
      %p196 = pneg %p195
      // Predicated region
      $region9: #{tpu_custom_call.1} parent=5 // pred_check
        _
      $region10: #{tpu_custom_call.1} parent=5 // pred_check_branch
        %198 = sbr.rel (%p195) target = $region12
      $region11: #{tpu_custom_call.1} parent=5 // pred_region
        %s199 = ssub.s32 %s23, 1
        // Predicated region
        $region13: #{tpu_custom_call.1} parent=11 // pred_check
          %p200 = pneg %p70
        $region14: #{tpu_custom_call.1} parent=11 // pred_check_branch
          %202 = sbr.rel (%p200) target = $region16
        $region15: #{tpu_custom_call.1} parent=11 // pred_region
          %s204 = ssub.s32 1024, 1024
          %205 = vsyncadd [#allocation6], %s204
          %s206 = sshll.u32 [#allocation5], 4
          %s207 = int_to_ptr.vmem [resolvable:$true] %s206
          %212 = dma.hbm_to_vmem [thread:$0]  %s1, 1024, %s207, [#allocation6], 64, 64, 4
        $region16: #{tpu_custom_call.1} parent=11 // pred_fallthru
          _
        // Predicated region
        $region17: #{tpu_custom_call.1} parent=11 // pred_check
          %p213 = pneg %p91
        $region18: #{tpu_custom_call.1} parent=11 // pred_check_branch
          %215 = sbr.rel (%p213) target = $region20
        $region19: #{tpu_custom_call.1} parent=11 // pred_region
          _
        $region20: #{tpu_custom_call.1} parent=11 // pred_fallthru
          _
        // Predicated region
        $region21: #{tpu_custom_call.1} parent=11 // pred_check
          %p216 = pneg %p112
        $region22: #{tpu_custom_call.1} parent=11 // pred_check_branch
          %218 = sbr.rel (%p216) target = $region24
        $region23: #{tpu_custom_call.1} parent=11 // pred_region
          %s220 = ssub.s32 1024, 1024
          %221 = vsyncadd [#allocation6], %s220
          %s222 = sshll.u32 [#allocation7], 4
          %s223 = int_to_ptr.vmem [resolvable:$true] %s222
          %228 = dma.hbm_to_vmem [thread:$0]  %s3, 1024, %s223, [#allocation6], 64, 64, 4
        $region24: #{tpu_custom_call.1} parent=11 // pred_fallthru
          _
        // Predicated region
        $region25: #{tpu_custom_call.1} parent=11 // pred_check
          %p229 = pneg %p133
        $region26: #{tpu_custom_call.1} parent=11 // pred_check_branch
          %231 = sbr.rel (%p229) target = $region28
        $region27: #{tpu_custom_call.1} parent=11 // pred_region
          _
        $region28: #{tpu_custom_call.1} parent=11 // pred_fallthru
          _
      $region12: #{tpu_custom_call.1} parent=5 // pred_fallthru
        _
      %p232 = scmp.lt.s32.totalorder %s23, 2
      // Predicated region
      $region29: #{tpu_custom_call.1} parent=5 // pred_check
        %p233 = pneg %p232
      $region30: #{tpu_custom_call.1} parent=5 // pred_check_branch
        %235 = sbr.rel (%p233) target = $region32
      $region31: #{tpu_custom_call.1} parent=5 // pred_region
        // Predicated region
        $region33: #{tpu_custom_call.1} parent=31 // pred_check
          %p236 = pneg %p43
        $region34: #{tpu_custom_call.1} parent=31 // pred_check_branch
          %238 = sbr.rel (%p236) target = $region36
        $region35: #{tpu_custom_call.1} parent=31 // pred_region
          %s239 = sand.u32 %s33, 1
          %s240 = scalar_lea.sflag [#allocation3], %s239
          %s241 = sand.u32 %s33, 1
          %s242 = smul.addr %s241, 8
          %s243 = scalar_lea.vmem [#allocation2], %s242
          %s245 = ssub.s32 128, 128
          %246 = vsyncadd %s240, %s245
          %s247 = smul.addr %s23, 128
          %s248 = scalar_lea.hbm %s0, %s247
          %s250 = sshll.u32 %s243, 4
          %s251 = int_to_ptr.vmem [resolvable:$true] %s250
          %253 = dma.hbm_to_vmem [thread:$0]  %s248, 128, %s251, %s240
        $region36: #{tpu_custom_call.1} parent=31 // pred_fallthru
          _
      $region32: #{tpu_custom_call.1} parent=5 // pred_fallthru
        _
      %p254 = scmp.le.s32.totalorder 1, %s23
      %p255 = scmp.lt.s32.totalorder %s23, 3
      %p256 = pnand %p254, %p255
      %p257 = pneg %p256
      // Predicated region
      $region37: #{tpu_custom_call.1} parent=5 // pred_check
        _
      $region38: #{tpu_custom_call.1} parent=5 // pred_check_branch
        %259 = sbr.rel (%p256) target = $region40
      $region39: #{tpu_custom_call.1} parent=5 // pred_region
        %s260 = ssub.s32 %s23, 1
        %s261 = sand.u32 %s36, 1
        %s262 = scalar_lea.sflag [#allocation3], %s261
        %s263 = sand.u32 %s36, 1
        %s264 = smul.addr %s263, 8
        %s265 = scalar_lea.vmem [#allocation2], %s264
        // Predicated region
        $region41: #{tpu_custom_call.1} parent=39 // pred_check
          %p266 = pneg %p49
        $region42: #{tpu_custom_call.1} parent=39 // pred_check_branch
          %268 = sbr.rel (%p266) target = $region44
        $region43: #{tpu_custom_call.1} parent=39 // pred_region
          %269 = dma.done %s262, 128
        $region44: #{tpu_custom_call.1} parent=39 // pred_fallthru
          _
        // Predicated region
        $region45: #{tpu_custom_call.1} parent=39 // pred_check
          %p270 = pneg %p70
        $region46: #{tpu_custom_call.1} parent=39 // pred_check_branch
          %272 = sbr.rel (%p270) target = $region48
        $region47: #{tpu_custom_call.1} parent=39 // pred_region
          %273 = dma.done [#allocation6], 1024
        $region48: #{tpu_custom_call.1} parent=39 // pred_fallthru
          _
        // Predicated region
        $region49: #{tpu_custom_call.1} parent=39 // pred_check
          %p274 = pneg %p112
        $region50: #{tpu_custom_call.1} parent=39 // pred_check_branch
          %276 = sbr.rel (%p274) target = $region52
        $region51: #{tpu_custom_call.1} parent=39 // pred_region
          %277 = dma.done [#allocation6], 1024
        $region52: #{tpu_custom_call.1} parent=39 // pred_fallthru
          _
        %s278 = sand.u32 %s36, 1
        %s279 = scalar_lea.sflag [#allocation3], %s278
        %s280 = sand.u32 %s36, 1
        %s281 = smul.addr %s280, 8
        %s282 = scalar_lea.vmem [#allocation2], %s281
        %p283 = pneg %p49
        %p284 = pneg %p46
        %p285 = pneg %p70
        %p286 = pneg %p67
        %p287 = pneg %p91
        %p288 = pneg %p88
        %p289 = pneg %p112
        %p290 = pneg %p109
        %p291 = pneg %p133
        %p292 = pneg %p130
        %p293 = pneg %p159
        %p294 = pneg %p156
        %s295 = sand.u32 %s146, 1
        %s296 = scalar_lea.sflag [#allocation4], %s295
        %s297 = sand.u32 %s146, 1
        %s298 = smul.addr %s297, 8
        %s299 = scalar_lea.vmem [#allocation8], %s298
        %p300 = pneg %p185
        %p301 = pneg %p182
        %s302 = sand.u32 %s172, 1
        %s303 = scalar_lea.sflag [#allocation10], %s302
        %s304 = sand.u32 %s172, 1
        %s305 = smul.addr %s304, 8
        %s306 = scalar_lea.vmem [#allocation9], %s305
        %v308 = vld [vmem:[%s265] sm:$0xff]
        %v309 = vpack.c.bf16 %v308, %v308
        %v310 = vld [vmem:[#allocation5] sm:$0xf]
        %v311 = vld [vmem:[#allocation5 + $0x4] sm:$0xf]
        %v312 = vld [vmem:[#allocation5 + $0x8] sm:$0xf]
        %v313 = vld [vmem:[#allocation5 + $0xc] sm:$0xf]
        %v314 = vld [vmem:[#allocation5 + $0x10] sm:$0xf]
        %v315 = vld [vmem:[#allocation5 + $0x14] sm:$0xf]
        %v316 = vld [vmem:[#allocation5 + $0x18] sm:$0xf]
        %v317 = vld [vmem:[#allocation5 + $0x1c] sm:$0xf]
        %v318 = vld [vmem:[#allocation5 + $0x20] sm:$0xf]
        %v319 = vld [vmem:[#allocation5 + $0x24] sm:$0xf]
        %v320 = vld [vmem:[#allocation5 + $0x28] sm:$0xf]
        %v321 = vld [vmem:[#allocation5 + $0x2c] sm:$0xf]
        %v322 = vld [vmem:[#allocation5 + $0x30] sm:$0xf]
        %v323 = vld [vmem:[#allocation5 + $0x34] sm:$0xf]
        %v324 = vld [vmem:[#allocation5 + $0x38] sm:$0xf]
        %v325 = vld [vmem:[#allocation5 + $0x3c] sm:$0xf]
        %v326 = vld [vmem:[%s2] sm:$0x1]
        %v328 = vlaneseq
        %v329 = vshrl.u32 %v328, 7
        %v330 = vsub.s32 0, %v329
        %v331 = vrot.slane %v326, %v330
        %v349 = vunpack.c.l.b16 %v310
        %v350 = vunpack.c.l.b16 %v311
        %v351 = vunpack.c.l.b16 %v312
        %v352 = vunpack.c.l.b16 %v313
        %v353 = vunpack.c.l.b16 %v314
        %v354 = vunpack.c.l.b16 %v315
        %v355 = vunpack.c.l.b16 %v316
        %v356 = vunpack.c.l.b16 %v317
        %v357 = vunpack.c.l.b16 %v318
        %v358 = vunpack.c.l.b16 %v319
        %v359 = vunpack.c.l.b16 %v320
        %v360 = vunpack.c.l.b16 %v321
        %v361 = vunpack.c.l.b16 %v322
        %v362 = vunpack.c.l.b16 %v323
        %v363 = vunpack.c.l.b16 %v324
        %v364 = vunpack.c.l.b16 %v325
        %v365 = vpack.c.b16 %v350, %v349
        %v366 = vpack.c.b16 %v352, %v351
        %v367 = vpack.c.b16 %v354, %v353
        %v368 = vpack.c.b16 %v356, %v355
        %v369 = vpack.c.b16 %v358, %v357
        %v370 = vpack.c.b16 %v360, %v359
        %v371 = vpack.c.b16 %v362, %v361
        %v372 = vpack.c.b16 %v364, %v363
        %381 = vmatprep.subr.bf16.mxu0 0
        %382 = vmatpush1.bf16.msra.mxu0 %v372
        %383 = vmatprep.subr.bf16.mxu0 0
        %384 = vmatpush1.bf16.msra.mxu0 %v371
        %385 = vmatprep.subr.bf16.mxu0 0
        %386 = vmatpush1.bf16.msra.mxu0 %v370
        %387 = vmatprep.subr.bf16.mxu0 0
        %388 = vmatpush1.bf16.msra.mxu0 %v369
        %389 = vmatprep.subr.bf16.mxu0 0
        %390 = vmatpush1.bf16.msra.mxu0 %v368
        %391 = vmatprep.subr.bf16.mxu0 0
        %392 = vmatpush1.bf16.msra.mxu0 %v367
        %393 = vmatprep.subr.bf16.mxu0 0
        %394 = vmatpush1.bf16.msra.mxu0 %v366
        %395 = vmatprep.subr.bf16.mxu0 0
        %396 = vmatpush1.bf16.msra.mxu0 %v365
        %397 = vmatprep.subr.bf16.mxu0 0
        %398 = vmatpush2.bf16.msra.mxu0 0
        %399 = vmatprep.subr.bf16.mxu0 0
        %400 = vmatpush2.bf16.msra.mxu0 0
        %401 = vmatprep.subr.bf16.mxu0 0
        %402 = vmatpush2.bf16.msra.mxu0 0
        %403 = vmatprep.subr.bf16.mxu0 0
        %404 = vmatpush2.bf16.msra.mxu0 0
        %405 = vmatprep.subr.bf16.mxu0 0
        %406 = vmatpush2.bf16.msra.mxu0 0
        %407 = vmatprep.subr.bf16.mxu0 0
        %408 = vmatpush2.bf16.msra.mxu0 0
        %409 = vmatprep.subr.bf16.mxu0 0
        %410 = vmatpush2.bf16.msra.mxu0 0
        %411 = vmatprep.subr.bf16.mxu0 0
        %412 = vmatpush2.bf16.msra.mxu0 0
        %413 = vmatprep.mubr.bf16.mxu0 0
        %414 = vmatmul.mubr.bf16.gmra.mxu0 %v309
        %v415 = vpop.f32.mrf.mxu0
        %v416 = vadd.f32 %v331, %v415
        %v417 = vpop.f32.mrf.mxu0
        %v418 = vpop.f32.mrf.mxu0
        %v419 = vpop.f32.mrf.mxu0
        %420 = vdwg.mxu0
        %v421 = vmax.f32 %v416, 0.0
        %v422 = vpack.c.bf16 %v421, %v421
        %423 = vst [vmem:[%s299] sm:$0xff] %v421
        %v424 = vld [vmem:[#allocation7] sm:$0xf]
        %v425 = vld [vmem:[#allocation7 + $0x4] sm:$0xf]
        %v426 = vld [vmem:[#allocation7 + $0x8] sm:$0xf]
        %v427 = vld [vmem:[#allocation7 + $0xc] sm:$0xf]
        %v428 = vld [vmem:[#allocation7 + $0x10] sm:$0xf]
        %v429 = vld [vmem:[#allocation7 + $0x14] sm:$0xf]
        %v430 = vld [vmem:[#allocation7 + $0x18] sm:$0xf]
        %v431 = vld [vmem:[#allocation7 + $0x1c] sm:$0xf]
        %v432 = vld [vmem:[#allocation7 + $0x20] sm:$0xf]
        %v433 = vld [vmem:[#allocation7 + $0x24] sm:$0xf]
        %v434 = vld [vmem:[#allocation7 + $0x28] sm:$0xf]
        %v435 = vld [vmem:[#allocation7 + $0x2c] sm:$0xf]
        %v436 = vld [vmem:[#allocation7 + $0x30] sm:$0xf]
        %v437 = vld [vmem:[#allocation7 + $0x34] sm:$0xf]
        %v438 = vld [vmem:[#allocation7 + $0x38] sm:$0xf]
        %v439 = vld [vmem:[#allocation7 + $0x3c] sm:$0xf]
        %v440 = vld [vmem:[%s4] sm:$0x1]
        %v442 = vlaneseq
        %v443 = vshrl.u32 %v442, 7
        %v444 = vsub.s32 0, %v443
        %v445 = vrot.slane %v440, %v444
        %v463 = vunpack.c.l.b16 %v424
        %v464 = vunpack.c.l.b16 %v425
        %v465 = vunpack.c.l.b16 %v426
        %v466 = vunpack.c.l.b16 %v427
        %v467 = vunpack.c.l.b16 %v428
        %v468 = vunpack.c.l.b16 %v429
        %v469 = vunpack.c.l.b16 %v430
        %v470 = vunpack.c.l.b16 %v431
        %v471 = vunpack.c.l.b16 %v432
        %v472 = vunpack.c.l.b16 %v433
        %v473 = vunpack.c.l.b16 %v434
        %v474 = vunpack.c.l.b16 %v435
        %v475 = vunpack.c.l.b16 %v436
        %v476 = vunpack.c.l.b16 %v437
        %v477 = vunpack.c.l.b16 %v438
        %v478 = vunpack.c.l.b16 %v439
        %v479 = vpack.c.b16 %v464, %v463
        %v480 = vpack.c.b16 %v466, %v465
        %v481 = vpack.c.b16 %v468, %v467
        %v482 = vpack.c.b16 %v470, %v469
        %v483 = vpack.c.b16 %v472, %v471
        %v484 = vpack.c.b16 %v474, %v473
        %v485 = vpack.c.b16 %v476, %v475
        %v486 = vpack.c.b16 %v478, %v477
        %495 = vmatprep.subr.bf16.mxu0 0
        %496 = vmatpush1.bf16.msra.mxu0 %v486
        %497 = vmatprep.subr.bf16.mxu0 0
        %498 = vmatpush1.bf16.msra.mxu0 %v485
        %499 = vmatprep.subr.bf16.mxu0 0
        %500 = vmatpush1.bf16.msra.mxu0 %v484
        %501 = vmatprep.subr.bf16.mxu0 0
        %502 = vmatpush1.bf16.msra.mxu0 %v483
        %503 = vmatprep.subr.bf16.mxu0 0
        %504 = vmatpush1.bf16.msra.mxu0 %v482
        %505 = vmatprep.subr.bf16.mxu0 0
        %506 = vmatpush1.bf16.msra.mxu0 %v481
        %507 = vmatprep.subr.bf16.mxu0 0
        %508 = vmatpush1.bf16.msra.mxu0 %v480
        %509 = vmatprep.subr.bf16.mxu0 0
        %510 = vmatpush1.bf16.msra.mxu0 %v479
        %511 = vmatprep.subr.bf16.mxu0 0
        %512 = vmatpush2.bf16.msra.mxu0 0
        %513 = vmatprep.subr.bf16.mxu0 0
        %514 = vmatpush2.bf16.msra.mxu0 0
        %515 = vmatprep.subr.bf16.mxu0 0
        %516 = vmatpush2.bf16.msra.mxu0 0
        %517 = vmatprep.subr.bf16.mxu0 0
        %518 = vmatpush2.bf16.msra.mxu0 0
        %519 = vmatprep.subr.bf16.mxu0 0
        %520 = vmatpush2.bf16.msra.mxu0 0
        %521 = vmatprep.subr.bf16.mxu0 0
        %522 = vmatpush2.bf16.msra.mxu0 0
        %523 = vmatprep.subr.bf16.mxu0 0
        %524 = vmatpush2.bf16.msra.mxu0 0
        %525 = vmatprep.subr.bf16.mxu0 0
        %526 = vmatpush2.bf16.msra.mxu0 0
        %527 = vmatprep.mubr.bf16.mxu0 0
        %528 = vmatmul.mubr.bf16.gmra.mxu0 %v422
        %v529 = vpop.f32.mrf.mxu0
        %v530 = vadd.f32 %v445, %v529
        %v531 = vpop.f32.mrf.mxu0
        %v532 = vpop.f32.mrf.mxu0
        %v533 = vpop.f32.mrf.mxu0
        %534 = vdwg.mxu0
        %535 = vst [vmem:[%s306] sm:$0xff] %v530
        %s536 = sand.u32 %s146, 1
        %s537 = scalar_lea.sflag [#allocation4], %s536
        %s538 = sand.u32 %s146, 1
        %s539 = smul.addr %s538, 8
        %s540 = scalar_lea.vmem [#allocation8], %s539
        %s541 = sand.u32 %s172, 1
        %s542 = scalar_lea.sflag [#allocation10], %s541
        %s543 = sand.u32 %s172, 1
        %s544 = smul.addr %s543, 8
        %s545 = scalar_lea.vmem [#allocation9], %s544
        // Predicated region
        $region53: #{tpu_custom_call.1} parent=39 // pred_check
          %p546 = pneg %p156
        $region54: #{tpu_custom_call.1} parent=39 // pred_check_branch
          %548 = sbr.rel (%p546) target = $region56
        $region55: #{tpu_custom_call.1} parent=39 // pred_region
          %s550 = ssub.s32 128, 128
          %551 = vsyncadd %s537, %s550
          %s552 = smul.addr %s28, 128
          %s553 = scalar_lea.hbm %s5, %s552
          %s555 = sshll.u32 %s540, 4
          %s556 = int_to_ptr.vmem [resolvable:$true] %s555
          %558 = dma.vmem_to_hbm [thread:$0]  %s556, 128, %s553, %s537
        $region56: #{tpu_custom_call.1} parent=39 // pred_fallthru
          _
        // Predicated region
        $region57: #{tpu_custom_call.1} parent=39 // pred_check
          %p559 = pneg %p182
        $region58: #{tpu_custom_call.1} parent=39 // pred_check_branch
          %561 = sbr.rel (%p559) target = $region60
        $region59: #{tpu_custom_call.1} parent=39 // pred_region
          %s563 = ssub.s32 128, 128
          %564 = vsyncadd %s542, %s563
          %s565 = smul.addr %s28, 128
          %s566 = scalar_lea.hbm %s6, %s565
          %s568 = sshll.u32 %s545, 4
          %s569 = int_to_ptr.vmem [resolvable:$true] %s568
          %571 = dma.vmem_to_hbm [thread:$0]  %s569, 128, %s566, %s542
        $region60: #{tpu_custom_call.1} parent=39 // pred_fallthru
          _
      $region40: #{tpu_custom_call.1} parent=5 // pred_fallthru
        _
      %p572 = scmp.le.s32.totalorder 2, %s23
      // Predicated region
      $region61: #{tpu_custom_call.1} parent=5 // pred_check
        %p573 = pneg %p572
      $region62: #{tpu_custom_call.1} parent=5 // pred_check_branch
        %575 = sbr.rel (%p573) target = $region64
      $region63: #{tpu_custom_call.1} parent=5 // pred_region
        %s576 = ssub.s32 %s23, 2
        // Predicated region
        $region65: #{tpu_custom_call.1} parent=63 // pred_check
          %p577 = pneg %p162
        $region66: #{tpu_custom_call.1} parent=63 // pred_check_branch
          %579 = sbr.rel (%p577) target = $region68
        $region67: #{tpu_custom_call.1} parent=63 // pred_region
          %s580 = sand.u32 %s147, 1
          %s581 = scalar_lea.sflag [#allocation4], %s580
          %s582 = sand.u32 %s147, 1
          %s583 = smul.addr %s582, 8
          %s584 = scalar_lea.vmem [#allocation8], %s583
          %585 = dma.done %s581, 128
        $region68: #{tpu_custom_call.1} parent=63 // pred_fallthru
          _
        // Predicated region
        $region69: #{tpu_custom_call.1} parent=63 // pred_check
          %p586 = pneg %p188
        $region70: #{tpu_custom_call.1} parent=63 // pred_check_branch
          %588 = sbr.rel (%p586) target = $region72
        $region71: #{tpu_custom_call.1} parent=63 // pred_region
          %s589 = sand.u32 %s173, 1
          %s590 = scalar_lea.sflag [#allocation10], %s589
          %s591 = sand.u32 %s173, 1
          %s592 = smul.addr %s591, 8
          %s593 = scalar_lea.vmem [#allocation9], %s592
          %594 = dma.done %s590, 128
        $region72: #{tpu_custom_call.1} parent=63 // pred_fallthru
          _
      $region64: #{tpu_custom_call.1} parent=5 // pred_fallthru
        _
    $region6: #{tpu_custom_call.1} parent=1 // loop_footer
      %s27 = sadd.s32 1, %s23
    $region7: #{tpu_custom_call.1} parent=1 // loop_footer_branch
      %22 = sbr.rel target = $region3
    $region8: #{tpu_custom_call.1} parent=1 // loop_exit
      _
    %595 = vsyncpa [#allocation3], 1
    %s596 = scalar_lea.sflag [#allocation3], 1
    %597 = vsyncpa %s596, 1
    %598 = vsyncpa [#allocation6], 1
    %599 = vsyncpa [#allocation4], 1
    %s600 = scalar_lea.sflag [#allocation4], 1
    %601 = vsyncpa %s600, 1
    %602 = vsyncpa [#allocation10], 1
    %s603 = scalar_lea.sflag [#allocation10], 1
    %604 = vsyncpa %s603, 1

</llo_original>
